<compile_context>
chip_gen: v5e
topology: v5e:2x2
jax: 0.10.0
libtpu: 0.0.40
codegen_flags: <defaults>
</compile_context>

<pallas_src>
import functools

import jax
import jax.numpy as jnp
from jax.experimental import pallas as pl
from jax.experimental.pallas import tpu as pltpu


def _round_up(x, m):
    return ((x + m - 1) // m) * m


def _ae_kernel(x_ref, w1t_ref, b1_ref, w2t_ref, b2_ref, enc_ref, dec_ref):
    """Fused autoencoder forward for one batch tile.

    x_ref:   (TB, D_in)     VMEM  (batch tile)
    w1t_ref: (D_in, D_out)  VMEM  (pre-transposed, resident across grid)
    b1_ref:  (1, D_out)     VMEM
    w2t_ref: (D_out, D_in)  VMEM  (pre-transposed, resident across grid)
    b2_ref:  (1, D_in)      VMEM
    enc_ref: (TB, D_out)    VMEM  output 1
    dec_ref: (TB, D_in)     VMEM  output 2
    """
    x = x_ref[...]

    # Encoder: ReLU(x @ W1^T + b1).  W1 already transposed to (D_in, D_out) in
    # the wrapper -> plain row-major MXU contraction, f32 accumulation.
    h = jnp.dot(x, w1t_ref[...], preferred_element_type=jnp.float32)
    h = jnp.maximum(h + b1_ref[...], 0.0)
    enc = h.astype(enc_ref.dtype)           # cast once; feeds both store & decoder
    enc_ref[...] = enc

    # Decoder: ReLU(enc @ W2^T + b2) using the (possibly low-precision) encoder
    # output, matching PyTorch mixed-precision numerics.
    d = jnp.dot(enc, w2t_ref[...], preferred_element_type=jnp.float32)
    d = jnp.maximum(d + b2_ref[...], 0.0)
    dec_ref[...] = d.astype(dec_ref.dtype)


@functools.partial(jax.jit, static_argnames=("max_tile_rows",))
def ae_forward(x, w1, b1, w2, b2, *, max_tile_rows=None):
    """Runs the AE forward pass as a single fused Pallas kernel.

    x : (B, D_in)
    w1: (D_out, D_in)  PyTorch nn.Linear convention
    b1: (D_out,)
    w2: (D_in, D_out)
    b2: (D_in,)
    max_tile_rows: optional cap on the batch tile (testing / tuning knob).
    Returns (encoder_out (B, D_out), decoder_out (B, D_in)).
    """
    B, D_in = x.shape
    D_out = w1.shape[0]
    assert w1.shape == (D_out, D_in) and w2.shape == (D_in, D_out)
    assert w1.dtype == x.dtype and w2.dtype == x.dtype, "weights must match x dtype"

    # One-time weight transpose to standard (K, N) contraction layout (amortized:
    # weights are DMA'd to VMEM once and stay resident across all grid steps).
    w1t = w1.T                      # (D_in, D_out)
    w2t = w2.T                      # (D_out, D_in)
    b1_2d = b1.reshape(1, D_out)    # 2-D rows for TPU lane broadcast
    b2_2d = b2.reshape(1, D_in)

    itemsize = jnp.dtype(x.dtype).itemsize
    # dtype-aware sublane multiple: 8 (f32), 16 (bf16), 32 (int8/fp8)
    sub = max(8, 32 // itemsize)

    # ---- VMEM-budget-driven batch tile --------------------------------------
    TILE_VMEM_BUDGET = 8 * 1024 * 1024           # for double-buffered batch tiles
    row_tile_bytes = 2 * (2 * D_in + D_out) * itemsize   # x + enc + dec, x2 buffers
    tb_cap = max(sub, TILE_VMEM_BUDGET // row_tile_bytes)
    tb_cap = min(tb_cap, 2048)                   # diminishing returns beyond this
    if max_tile_rows is not None:
        tb_cap = min(tb_cap, max(sub, max_tile_rows))
    tb_cap = max(sub, (tb_cap // sub) * sub)     # round down, stay within budget

    if B <= tb_cap:
        tb = B                                   # whole batch: 1 step (best on 1-TC chips)
        if B >= 1024:                            # large batch: 2 even tiles feed both v7x TCs
            tb = _round_up(pl.cdiv(B, 2), sub)
    else:
        tb = tb_cap
        n_steps = pl.cdiv(B, tb)
        if n_steps % 2 == 1:                     # keep grid even for v7x dual-TC sharding
            tb = max(sub, _round_up(pl.cdiv(B, n_steps + 1), sub))

    grid = (pl.cdiv(B, tb),)

    # ---- VMEM limit from the actual footprint -------------------------------
    resident_bytes = 2 * (w1t.size + b1_2d.size + w2t.size + b2_2d.size) * itemsize
    tile_bytes = 2 * tb * (2 * D_in + D_out) * itemsize
    vmem_limit = int(1.5 * (resident_bytes + tile_bytes)) + (1 << 20)
    vmem_limit = max(4 * 1024 * 1024, min(vmem_limit, 64 * 1024 * 1024))

    flops = 4 * B * D_in * D_out                 # two matmuls: 2*B*D_in*D_out each
    bytes_accessed = (
        x.size + w1.size + b1.size + w2.size + b2.size      # reads
        + B * D_out + B * D_in                               # writes
    ) * itemsize

    enc, dec = pl.pallas_call(
        _ae_kernel,
        out_shape=(
            jax.ShapeDtypeStruct((B, D_out), x.dtype),
            jax.ShapeDtypeStruct((B, D_in), x.dtype),
        ),
        grid=grid,
        in_specs=[
            pl.BlockSpec((tb, D_in), lambda i: (i, 0)),      # x: batch-tiled
            pl.BlockSpec((D_in, D_out), lambda i: (0, 0)),   # w1^T: resident
            pl.BlockSpec((1, D_out), lambda i: (0, 0)),      # b1: resident
            pl.BlockSpec((D_out, D_in), lambda i: (0, 0)),   # w2^T: resident
            pl.BlockSpec((1, D_in), lambda i: (0, 0)),       # b2: resident
        ],
        out_specs=(
            pl.BlockSpec((tb, D_out), lambda i: (i, 0)),     # enc: batch-tiled
            pl.BlockSpec((tb, D_in), lambda i: (i, 0)),      # dec: batch-tiled
        ),
        compiler_params=pltpu.CompilerParams(
            dimension_semantics=("parallel",),   # shard batch steps across TCs (v7x)
            vmem_limit_bytes=vmem_limit,
        ),
        cost_estimate=pl.CostEstimate(
            flops=flops, transcendentals=0, bytes_accessed=bytes_accessed),
    )(x, w1t, b1_2d, w2t, b2_2d)
    return enc, dec


def init_ae_params(key, d_in, d_out, dtype=jnp.float32):
    """Deterministic init mimicking PyTorch nn.Linear default (uniform +/-1/sqrt(fan_in))."""
    k1, k2, k3, k4 = jax.random.split(key, 4)
    bound_enc = 1.0 / jnp.sqrt(d_in)
    bound_dec = 1.0 / jnp.sqrt(d_out)
    w1 = jax.random.uniform(k1, (d_out, d_in), dtype, -bound_enc, bound_enc)
    b1 = jax.random.uniform(k2, (d_out,), dtype, -bound_enc, bound_enc)
    w2 = jax.random.uniform(k3, (d_in, d_out), dtype, -bound_dec, bound_dec)
    b2 = jax.random.uniform(k4, (d_in,), dtype, -bound_dec, bound_dec)
    return w1, b1, w2, b2


def _reference(x, w1, b1, w2, b2):
    enc = jnp.maximum(x @ w1.T + b1, 0.0)
    dec = jnp.maximum(enc @ w2.T + b2, 0.0)
    return enc, dec


if __name__ == "__main__":
    key = jax.random.PRNGKey(0)
    k_x, k_p = jax.random.split(key)

    batch = 256      # single whole-batch tile path
    inputs = 32      # AE(inputs=32, outputs=16)
    outputs = 16

    x = jax.random.normal(k_x, (batch, inputs), jnp.float32)
    w1, b1, w2, b2 = init_ae_params(k_p, inputs, outputs)

    enc, dec = ae_forward(x, w1, b1, w2, b2)
    jax.block_until_ready((enc, dec))

    enc_ref, dec_ref = _reference(x, w1, b1, w2, b2)
    assert enc.shape == (batch, outputs) and dec.shape == (batch, inputs)
    assert jnp.allclose(enc, enc_ref, atol=1e-5, rtol=1e-5)
    assert jnp.allclose(dec, dec_ref, atol=1e-5, rtol=1e-5)

    # Tiny-batch path (tb == B == 8, grid=(1,)).
    x_small = jax.random.normal(k_x, (8, inputs), jnp.float32)
    enc_s, dec_s = ae_forward(x_small, w1, b1, w2, b2)
    jax.block_until_ready((enc_s, dec_s))
    enc_s_ref, dec_s_ref = _reference(x_small, w1, b1, w2, b2)
    assert jnp.allclose(enc_s, enc_s_ref, atol=1e-5, rtol=1e-5)
    assert jnp.allclose(dec_s, dec_s_ref, atol=1e-5, rtol=1e-5)

    # Multi-step / even-grid / partial-final-tile path (B=300, forced 128-row cap
    # -> even grid with a ragged last tile).
    x_odd = jax.random.normal(k_x, (300, inputs), jnp.float32)
    enc_o, dec_o = ae_forward(x_odd, w1, b1, w2, b2, max_tile_rows=128)
    jax.block_until_ready((enc_o, dec_o))
    enc_o_ref, dec_o_ref = _reference(x_odd, w1, b1, w2, b2)
    assert jnp.allclose(enc_o, enc_o_ref, atol=1e-5, rtol=1e-5)
    assert jnp.allclose(dec_o, dec_o_ref, atol=1e-5, rtol=1e-5)

    print("KERNEL_OK")
</pallas_src>

<mosaic_0001>
module attributes {stable_mosaic.version = 11 : i64} {
  func.func @_ae_kernel(%arg0: i32, %arg1: memref<256x32xf32, #tpu.memory_space<vmem>>, %arg2: memref<32x16xf32, #tpu.memory_space<vmem>>, %arg3: memref<1x16xf32, #tpu.memory_space<vmem>>, %arg4: memref<16x32xf32, #tpu.memory_space<vmem>>, %arg5: memref<1x32xf32, #tpu.memory_space<vmem>>, %arg6: memref<256x16xf32, #tpu.memory_space<vmem>>, %arg7: memref<256x32xf32, #tpu.memory_space<vmem>>) attributes {dimension_semantics = [#tpu.dimension_semantics<parallel>], iteration_bounds = array<i64: 1>, scalar_prefetch = 0 : i64, scratch_operands = 0 : i64, tpu.core_type = #tpu.core_type<tc>, window_params = [{transform_indices = @transform_0, window_bounds = array<i64: 256, 32>}, {pipeline_mode = #tpu.pipeline_mode<synchronous>, transform_indices = @transform_1, window_bounds = array<i64: 32, 16>}, {pipeline_mode = #tpu.pipeline_mode<synchronous>, transform_indices = @transform_2, window_bounds = array<i64: 1, 16>}, {pipeline_mode = #tpu.pipeline_mode<synchronous>, transform_indices = @transform_3, window_bounds = array<i64: 16, 32>}, {pipeline_mode = #tpu.pipeline_mode<synchronous>, transform_indices = @transform_4, window_bounds = array<i64: 1, 32>}, {transform_indices = @transform_5, window_bounds = array<i64: 256, 16>}, {transform_indices = @transform_6, window_bounds = array<i64: 256, 32>}]} {
    %c0 = arith.constant 0 : index
    %c0_0 = arith.constant 0 : index
    %0 = vector.load %arg1[%c0, %c0_0] : memref<256x32xf32, #tpu.memory_space<vmem>>, vector<256x32xf32>
    %c0_1 = arith.constant 0 : index
    %c0_2 = arith.constant 0 : index
    %1 = vector.load %arg2[%c0_1, %c0_2] : memref<32x16xf32, #tpu.memory_space<vmem>>, vector<32x16xf32>
    %cst = arith.constant dense<0.000000e+00> : vector<256x16xf32>
    %2 = tpu.matmul %0, %1, %cst {dimension_numbers = #tpu.dot_dimension_numbers<[1], [0], [0], [1], [0, 0, 1, 1], [], []>} : vector<256x32xf32>, vector<32x16xf32>, vector<256x16xf32> -> vector<256x16xf32>
    %c0_3 = arith.constant 0 : index
    %c0_4 = arith.constant 0 : index
    %3 = vector.load %arg3[%c0_3, %c0_4] : memref<1x16xf32, #tpu.memory_space<vmem>>, vector<1x16xf32>
    %4 = vector.broadcast %3 : vector<1x16xf32> to vector<256x16xf32>
    %5 = arith.addf %2, %4 : vector<256x16xf32>
    %cst_5 = arith.constant 0.000000e+00 : f32
    %6 = vector.broadcast %cst_5 : f32 to vector<256x16xf32>
    %7 = arith.maximumf %5, %6 : vector<256x16xf32>
    %c0_6 = arith.constant 0 : index
    %c0_7 = arith.constant 0 : index
    %8 = vector.load %arg6[%c0_6, %c0_7] : memref<256x16xf32, #tpu.memory_space<vmem>>, vector<256x16xf32>
    tpu.vector_store %arg6[%c0_6, %c0_7], %7 {strides = array<i32>} : memref<256x16xf32, #tpu.memory_space<vmem>>, vector<256x16xf32>,
    %c0_8 = arith.constant 0 : index
    %c0_9 = arith.constant 0 : index
    %9 = vector.load %arg4[%c0_8, %c0_9] : memref<16x32xf32, #tpu.memory_space<vmem>>, vector<16x32xf32>
    %cst_10 = arith.constant dense<0.000000e+00> : vector<256x32xf32>
    %10 = tpu.matmul %7, %9, %cst_10 {dimension_numbers = #tpu.dot_dimension_numbers<[1], [0], [0], [1], [0, 0, 1, 1], [], []>} : vector<256x16xf32>, vector<16x32xf32>, vector<256x32xf32> -> vector<256x32xf32>
    %c0_11 = arith.constant 0 : index
    %c0_12 = arith.constant 0 : index
    %11 = vector.load %arg5[%c0_11, %c0_12] : memref<1x32xf32, #tpu.memory_space<vmem>>, vector<1x32xf32>
    %12 = vector.broadcast %11 : vector<1x32xf32> to vector<256x32xf32>
    %13 = arith.addf %10, %12 : vector<256x32xf32>
    %cst_13 = arith.constant 0.000000e+00 : f32
    %14 = vector.broadcast %cst_13 : f32 to vector<256x32xf32>
    %15 = arith.maximumf %13, %14 : vector<256x32xf32>
    %c0_14 = arith.constant 0 : index
    %c0_15 = arith.constant 0 : index
    %16 = vector.load %arg7[%c0_14, %c0_15] : memref<256x32xf32, #tpu.memory_space<vmem>>, vector<256x32xf32>
    tpu.vector_store %arg7[%c0_14, %c0_15], %15 {strides = array<i32>} : memref<256x32xf32, #tpu.memory_space<vmem>>, vector<256x32xf32>,
    return
  }
  func.func @transform_0(%arg0: i32) -> (i32, i32) {
    %c0_i32 = arith.constant 0 : i32
    %c0_i32_0 = arith.constant 0 : i32
    return %arg0, %c0_i32 : i32, i32
  }
  func.func @transform_1(%arg0: i32) -> (i32, i32) {
    %c0_i32 = arith.constant 0 : i32
    %c0_i32_0 = arith.constant 0 : i32
    %c0_i32_1 = arith.constant 0 : i32
    return %c0_i32, %c0_i32_0 : i32, i32
  }
  func.func @transform_2(%arg0: i32) -> (i32, i32) {
    %c0_i32 = arith.constant 0 : i32
    %c0_i32_0 = arith.constant 0 : i32
    %c0_i32_1 = arith.constant 0 : i32
    return %c0_i32, %c0_i32_0 : i32, i32
  }
  func.func @transform_3(%arg0: i32) -> (i32, i32) {
    %c0_i32 = arith.constant 0 : i32
    %c0_i32_0 = arith.constant 0 : i32
    %c0_i32_1 = arith.constant 0 : i32
    return %c0_i32, %c0_i32_0 : i32, i32
  }
  func.func @transform_4(%arg0: i32) -> (i32, i32) {
    %c0_i32 = arith.constant 0 : i32
    %c0_i32_0 = arith.constant 0 : i32
    %c0_i32_1 = arith.constant 0 : i32
    return %c0_i32, %c0_i32_0 : i32, i32
  }
  func.func @transform_5(%arg0: i32) -> (i32, i32) {
    %c0_i32 = arith.constant 0 : i32
    %c0_i32_0 = arith.constant 0 : i32
    return %arg0, %c0_i32 : i32, i32
  }
  func.func @transform_6(%arg0: i32) -> (i32, i32) {
    %c0_i32 = arith.constant 0 : i32
    %c0_i32_0 = arith.constant 0 : i32
    return %arg0, %c0_i32 : i32, i32
  }
}

</mosaic_0001>

<llo_original>
// kernel: ae_forward.1
$region0: #{ae_forward.1}
  #allocation0 [shape = 'u32[]', space=smem, size = 0x4, offset = 0x4, fixed_abs, tag = 'smem constant byte address 0x4 - core index']
  #allocation1 [shape = 'u32[72,128]{1,0:T(1,128)}', space=vmem, size = 0x9000, scoped, tag = 'internal scratch']
  %s0 = inlined_call_operand.vmem [shape: f32[256,32], index: 0, kind: input, shape index: {}]
  %s1 = inlined_call_operand.vmem [shape: f32[32,16], index: 1, kind: input, shape index: {}]
  %s2 = inlined_call_operand.vmem [shape: f32[1,16], index: 2, kind: input, shape index: {}]
  %s3 = inlined_call_operand.vmem [shape: f32[16,32], index: 3, kind: input, shape index: {}]
  %s4 = inlined_call_operand.vmem [shape: f32[1,32], index: 4, kind: input, shape index: {}]
  %s5 = inlined_call_operand.vmem [shape: f32[256,16], index: 5, kind: output, shape index: {0}]
  %s6 = inlined_call_operand.vmem [shape: f32[256,32], index: 6, kind: output, shape index: {1}]
  %7 = xla_tuple %s5, %s6
  %s8 = sld [smem:[#allocation0]]
  $region38: #{ae_forward.1} parent=0
    _
  %s10 = ssub.s32 1, %s8
  %s11 = scalar_select 0, %s10, %s8
  // Predicated region
  $region2: #{ae_forward.1} parent=0 // pred_check
    _
  $region3: #{ae_forward.1} parent=0 // pred_check_branch
    %13 = sbr.rel (0) target = $region5
  $region4: #{ae_forward.1} parent=0 // pred_region
    _
  $region5: #{ae_forward.1} parent=0 // pred_fallthru
    _
  // Predicated region
  $region6: #{ae_forward.1} parent=0 // pred_check
    _
  $region7: #{ae_forward.1} parent=0 // pred_check_branch
    %15 = sbr.rel (0) target = $region9
  $region8: #{ae_forward.1} parent=0 // pred_region
    _
  $region9: #{ae_forward.1} parent=0 // pred_fallthru
    _
  // Predicated region
  $region10: #{ae_forward.1} parent=0 // pred_check
    _
  $region11: #{ae_forward.1} parent=0 // pred_check_branch
    %17 = sbr.rel (0) target = $region13
  $region12: #{ae_forward.1} parent=0 // pred_region
    _
  $region13: #{ae_forward.1} parent=0 // pred_fallthru
    _
  // Predicated region
  $region14: #{ae_forward.1} parent=0 // pred_check
    _
  $region15: #{ae_forward.1} parent=0 // pred_check_branch
    %19 = sbr.rel (0) target = $region17
  $region16: #{ae_forward.1} parent=0 // pred_region
    _
  $region17: #{ae_forward.1} parent=0 // pred_fallthru
    _
  // Predicated region
  $region18: #{ae_forward.1} parent=0 // pred_check
    _
  $region19: #{ae_forward.1} parent=0 // pred_check_branch
    %21 = sbr.rel (0) target = $region21
  $region20: #{ae_forward.1} parent=0 // pred_region
    _
  $region21: #{ae_forward.1} parent=0 // pred_fallthru
    _
  %v22 = vld [vmem:[%s0] sm:$0xff]
  %v23 = vld [vmem:[%s0 + $0x8] sm:$0xff]
  %v24 = vld [vmem:[%s0 + $0x10] sm:$0xff]
  %v25 = vld [vmem:[%s0 + $0x18] sm:$0xff]
  %v26 = vld [vmem:[%s0 + $0x20] sm:$0xff]
  %v27 = vld [vmem:[%s0 + $0x28] sm:$0xff]
  %v28 = vld [vmem:[%s0 + $0x30] sm:$0xff]
  %v29 = vld [vmem:[%s0 + $0x38] sm:$0xff]
  %v30 = vld [vmem:[%s0 + $0x40] sm:$0xff]
  %v31 = vld [vmem:[%s0 + $0x48] sm:$0xff]
  %v32 = vld [vmem:[%s0 + $0x50] sm:$0xff]
  %v33 = vld [vmem:[%s0 + $0x58] sm:$0xff]
  %v34 = vld [vmem:[%s0 + $0x60] sm:$0xff]
  %v35 = vld [vmem:[%s0 + $0x68] sm:$0xff]
  %v36 = vld [vmem:[%s0 + $0x70] sm:$0xff]
  %v37 = vld [vmem:[%s0 + $0x78] sm:$0xff]
  %v38 = vld [vmem:[%s0 + $0x80] sm:$0xff]
  %v39 = vld [vmem:[%s0 + $0x88] sm:$0xff]
  %v40 = vld [vmem:[%s0 + $0x90] sm:$0xff]
  %v41 = vld [vmem:[%s0 + $0x98] sm:$0xff]
  %v42 = vld [vmem:[%s0 + $0xa0] sm:$0xff]
  %v43 = vld [vmem:[%s0 + $0xa8] sm:$0xff]
  %v44 = vld [vmem:[%s0 + $0xb0] sm:$0xff]
  %v45 = vld [vmem:[%s0 + $0xb8] sm:$0xff]
  %v46 = vld [vmem:[%s0 + $0xc0] sm:$0xff]
  %v47 = vld [vmem:[%s0 + $0xc8] sm:$0xff]
  %v48 = vld [vmem:[%s0 + $0xd0] sm:$0xff]
  %v49 = vld [vmem:[%s0 + $0xd8] sm:$0xff]
  %v50 = vld [vmem:[%s0 + $0xe0] sm:$0xff]
  %v51 = vld [vmem:[%s0 + $0xe8] sm:$0xff]
  %v52 = vld [vmem:[%s0 + $0xf0] sm:$0xff]
  %v53 = vld [vmem:[%s0 + $0xf8] sm:$0xff]
  %v54 = vld [vmem:[%s1] sm:$0xff]
  %v55 = vld [vmem:[%s1 + $0x8] sm:$0xff]
  %v56 = vld [vmem:[%s1 + $0x10] sm:$0xff]
  %v57 = vld [vmem:[%s1 + $0x18] sm:$0xff]
  %v58 = vld [vmem:[%s2] sm:$0x1]
  %v60 = vperm.slane %v58, 0
  %vm62 = vcmask 261120
  %v64 = vsel %vm62, %v22, 0
  %v67 = vsel %vm62, %v23, 0
  %v70 = vsel %vm62, %v24, 0
  %v73 = vsel %vm62, %v25, 0
  %v76 = vsel %vm62, %v26, 0
  %v79 = vsel %vm62, %v27, 0
  %v82 = vsel %vm62, %v28, 0
  %v85 = vsel %vm62, %v29, 0
  %v88 = vsel %vm62, %v30, 0
  %v91 = vsel %vm62, %v31, 0
  %v94 = vsel %vm62, %v32, 0
  %v97 = vsel %vm62, %v33, 0
  %v100 = vsel %vm62, %v34, 0
  %v103 = vsel %vm62, %v35, 0
  %v106 = vsel %vm62, %v36, 0
  %v109 = vsel %vm62, %v37, 0
  %v112 = vsel %vm62, %v38, 0
  %v115 = vsel %vm62, %v39, 0
  %v118 = vsel %vm62, %v40, 0
  %v121 = vsel %vm62, %v41, 0
  %v124 = vsel %vm62, %v42, 0
  %v127 = vsel %vm62, %v43, 0
  %v130 = vsel %vm62, %v44, 0
  %v133 = vsel %vm62, %v45, 0
  %v136 = vsel %vm62, %v46, 0
  %v139 = vsel %vm62, %v47, 0
  %v142 = vsel %vm62, %v48, 0
  %v145 = vsel %vm62, %v49, 0
  %v148 = vsel %vm62, %v50, 0
  %v151 = vsel %vm62, %v51, 0
  %v154 = vsel %vm62, %v52, 0
  %v157 = vsel %vm62, %v53, 0
  %159 = vmatpush.msra.mxu0 0.0
  %160 = vmatpush.msra.mxu0 0.0
  %161 = vmatpush.msra.mxu0 0.0
  %162 = vmatpush.msra.mxu0 0.0
  %163 = vmatpush.msra.mxu0 0.0
  %164 = vmatpush.msra.mxu0 0.0
  %165 = vmatpush.msra.mxu0 0.0
  %166 = vmatpush.msra.mxu0 0.0
  %167 = vmatpush.msra.mxu0 0.0
  %168 = vmatpush.msra.mxu0 0.0
  %169 = vmatpush.msra.mxu0 0.0
  %170 = vmatpush.msra.mxu0 0.0
  %171 = vmatpush.msra.mxu0 %v57
  %172 = vmatpush.msra.mxu0 %v56
  %173 = vmatpush.msra.mxu0 %v55
  %174 = vmatpush.msra.mxu0 %v54
  %175 = vmatmul.f32.gmra.mxu0 %v64
  %v176 = vpop.f32.mrf.mxu0
  %v177 = vadd.f32 %v60, %v176
  %178 = vmatmul.f32.gmra.mxu0 %v67
  %v179 = vpop.f32.mrf.mxu0
  %v180 = vadd.f32 %v60, %v179
  %181 = vmatmul.f32.gmra.mxu0 %v70
  %v182 = vpop.f32.mrf.mxu0
  %v183 = vadd.f32 %v60, %v182
  %184 = vmatmul.f32.gmra.mxu0 %v73
  %v185 = vpop.f32.mrf.mxu0
  %v186 = vadd.f32 %v60, %v185
  %187 = vmatmul.f32.gmra.mxu0 %v76
  %v188 = vpop.f32.mrf.mxu0
  %v189 = vadd.f32 %v60, %v188
  %190 = vmatmul.f32.gmra.mxu0 %v79
  %v191 = vpop.f32.mrf.mxu0
  %v192 = vadd.f32 %v60, %v191
  %193 = vmatmul.f32.gmra.mxu0 %v82
  %v194 = vpop.f32.mrf.mxu0
  %v195 = vadd.f32 %v60, %v194
  %196 = vmatmul.f32.gmra.mxu0 %v85
  %v197 = vpop.f32.mrf.mxu0
  %v198 = vadd.f32 %v60, %v197
  %199 = vmatmul.f32.gmra.mxu0 %v88
  %v200 = vpop.f32.mrf.mxu0
  %v201 = vadd.f32 %v60, %v200
  %202 = vmatmul.f32.gmra.mxu0 %v91
  %v203 = vpop.f32.mrf.mxu0
  %v204 = vadd.f32 %v60, %v203
  %205 = vmatmul.f32.gmra.mxu0 %v94
  %v206 = vpop.f32.mrf.mxu0
  %v207 = vadd.f32 %v60, %v206
  %208 = vmatmul.f32.gmra.mxu0 %v97
  %v209 = vpop.f32.mrf.mxu0
  %v210 = vadd.f32 %v60, %v209
  %211 = vmatmul.f32.gmra.mxu0 %v100
  %v212 = vpop.f32.mrf.mxu0
  %v213 = vadd.f32 %v60, %v212
  %214 = vmatmul.f32.gmra.mxu0 %v103
  %v215 = vpop.f32.mrf.mxu0
  %v216 = vadd.f32 %v60, %v215
  %217 = vmatmul.f32.gmra.mxu0 %v106
  %v218 = vpop.f32.mrf.mxu0
  %v219 = vadd.f32 %v60, %v218
  %220 = vmatmul.f32.gmra.mxu0 %v109
  %v221 = vpop.f32.mrf.mxu0
  %v222 = vadd.f32 %v60, %v221
  %223 = vmatmul.f32.gmra.mxu0 %v112
  %v224 = vpop.f32.mrf.mxu0
  %v225 = vadd.f32 %v60, %v224
  %226 = vmatmul.f32.gmra.mxu0 %v115
  %v227 = vpop.f32.mrf.mxu0
  %v228 = vadd.f32 %v60, %v227
  %229 = vmatmul.f32.gmra.mxu0 %v118
  %v230 = vpop.f32.mrf.mxu0
  %v231 = vadd.f32 %v60, %v230
  %232 = vmatmul.f32.gmra.mxu0 %v121
  %v233 = vpop.f32.mrf.mxu0
  %v234 = vadd.f32 %v60, %v233
  %235 = vmatmul.f32.gmra.mxu0 %v124
  %v236 = vpop.f32.mrf.mxu0
  %v237 = vadd.f32 %v60, %v236
  %238 = vmatmul.f32.gmra.mxu0 %v127
  %v239 = vpop.f32.mrf.mxu0
  %v240 = vadd.f32 %v60, %v239
  %241 = vmatmul.f32.gmra.mxu0 %v130
  %v242 = vpop.f32.mrf.mxu0
  %v243 = vadd.f32 %v60, %v242
  %244 = vmatmul.f32.gmra.mxu0 %v133
  %v245 = vpop.f32.mrf.mxu0
  %v246 = vadd.f32 %v60, %v245
  %247 = vmatmul.f32.gmra.mxu0 %v136
  %v248 = vpop.f32.mrf.mxu0
  %v249 = vadd.f32 %v60, %v248
  %250 = vmatmul.f32.gmra.mxu0 %v139
  %v251 = vpop.f32.mrf.mxu0
  %v252 = vadd.f32 %v60, %v251
  %253 = vmatmul.f32.gmra.mxu0 %v142
  %v254 = vpop.f32.mrf.mxu0
  %v255 = vadd.f32 %v60, %v254
  %256 = vmatmul.f32.gmra.mxu0 %v145
  %v257 = vpop.f32.mrf.mxu0
  %v258 = vadd.f32 %v60, %v257
  %259 = vmatmul.f32.gmra.mxu0 %v148
  %v260 = vpop.f32.mrf.mxu0
  %v261 = vadd.f32 %v60, %v260
  %262 = vmatmul.f32.gmra.mxu0 %v151
  %v263 = vpop.f32.mrf.mxu0
  %v264 = vadd.f32 %v60, %v263
  %265 = vmatmul.f32.gmra.mxu0 %v154
  %v266 = vpop.f32.mrf.mxu0
  %v267 = vadd.f32 %v60, %v266
  %268 = vmatmul.f32.gmra.mxu0 %v157
  %v269 = vpop.f32.mrf.mxu0
  %v270 = vadd.f32 %v60, %v269
  %271 = vdwg.mxu0
  %v272 = vmax.f32 %v177, 0.0
  %v273 = vmax.f32 %v180, 0.0
  %v274 = vmax.f32 %v183, 0.0
  %v275 = vmax.f32 %v186, 0.0
  %v276 = vmax.f32 %v189, 0.0
  %v277 = vmax.f32 %v192, 0.0
  %v278 = vmax.f32 %v195, 0.0
  %v279 = vmax.f32 %v198, 0.0
  %v280 = vmax.f32 %v201, 0.0
  %v281 = vmax.f32 %v204, 0.0
  %v282 = vmax.f32 %v207, 0.0
  %v283 = vmax.f32 %v210, 0.0
  %v284 = vmax.f32 %v213, 0.0
  %v285 = vmax.f32 %v216, 0.0
  %v286 = vmax.f32 %v219, 0.0
  %v287 = vmax.f32 %v222, 0.0
  %v288 = vmax.f32 %v225, 0.0
  %v289 = vmax.f32 %v228, 0.0
  %v290 = vmax.f32 %v231, 0.0
  %v291 = vmax.f32 %v234, 0.0
  %v292 = vmax.f32 %v237, 0.0
  %v293 = vmax.f32 %v240, 0.0
  %v294 = vmax.f32 %v243, 0.0
  %v295 = vmax.f32 %v246, 0.0
  %v296 = vmax.f32 %v249, 0.0
  %v297 = vmax.f32 %v252, 0.0
  %v298 = vmax.f32 %v255, 0.0
  %v299 = vmax.f32 %v258, 0.0
  %v300 = vmax.f32 %v261, 0.0
  %v301 = vmax.f32 %v264, 0.0
  %v302 = vmax.f32 %v267, 0.0
  %v303 = vmax.f32 %v270, 0.0
  %vm304 = vcmask 130048
  %305 = vst.msk [vmem:[%s5] sm:$0xff] %vm304, %v272
  %306 = vst.msk [vmem:[%s5 + $0x8] sm:$0xff] %vm304, %v273
  %307 = vst.msk [vmem:[%s5 + $0x10] sm:$0xff] %vm304, %v274
  %308 = vst.msk [vmem:[%s5 + $0x18] sm:$0xff] %vm304, %v275
  %309 = vst.msk [vmem:[%s5 + $0x20] sm:$0xff] %vm304, %v276
  %310 = vst.msk [vmem:[%s5 + $0x28] sm:$0xff] %vm304, %v277
  %311 = vst.msk [vmem:[%s5 + $0x30] sm:$0xff] %vm304, %v278
  %312 = vst.msk [vmem:[%s5 + $0x38] sm:$0xff] %vm304, %v279
  %313 = vst.msk [vmem:[%s5 + $0x40] sm:$0xff] %vm304, %v280
  %314 = vst.msk [vmem:[%s5 + $0x48] sm:$0xff] %vm304, %v281
  %315 = vst.msk [vmem:[%s5 + $0x50] sm:$0xff] %vm304, %v282
  %316 = vst.msk [vmem:[%s5 + $0x58] sm:$0xff] %vm304, %v283
  %317 = vst.msk [vmem:[%s5 + $0x60] sm:$0xff] %vm304, %v284
  %318 = vst.msk [vmem:[%s5 + $0x68] sm:$0xff] %vm304, %v285
  %319 = vst.msk [vmem:[%s5 + $0x70] sm:$0xff] %vm304, %v286
  %320 = vst.msk [vmem:[%s5 + $0x78] sm:$0xff] %vm304, %v287
  %321 = vst.msk [vmem:[%s5 + $0x80] sm:$0xff] %vm304, %v288
  %322 = vst.msk [vmem:[%s5 + $0x88] sm:$0xff] %vm304, %v289
  %323 = vst.msk [vmem:[%s5 + $0x90] sm:$0xff] %vm304, %v290
  %324 = vst.msk [vmem:[%s5 + $0x98] sm:$0xff] %vm304, %v291
  %325 = vst.msk [vmem:[%s5 + $0xa0] sm:$0xff] %vm304, %v292
  %326 = vst.msk [vmem:[%s5 + $0xa8] sm:$0xff] %vm304, %v293
  %327 = vst.msk [vmem:[%s5 + $0xb0] sm:$0xff] %vm304, %v294
  %328 = vst.msk [vmem:[%s5 + $0xb8] sm:$0xff] %vm304, %v295
  %329 = vst.msk [vmem:[%s5 + $0xc0] sm:$0xff] %vm304, %v296
  %330 = vst.msk [vmem:[%s5 + $0xc8] sm:$0xff] %vm304, %v297
  %331 = vst.msk [vmem:[%s5 + $0xd0] sm:$0xff] %vm304, %v298
  %332 = vst.msk [vmem:[%s5 + $0xd8] sm:$0xff] %vm304, %v299
  %333 = vst.msk [vmem:[%s5 + $0xe0] sm:$0xff] %vm304, %v300
  %334 = vst.msk [vmem:[%s5 + $0xe8] sm:$0xff] %vm304, %v301
  %335 = vst.msk [vmem:[%s5 + $0xf0] sm:$0xff] %vm304, %v302
  %336 = vst.msk [vmem:[%s5 + $0xf8] sm:$0xff] %vm304, %v303
  %v337 = vld [vmem:[%s3] sm:$0xff]
  %v338 = vld [vmem:[%s3 + $0x8] sm:$0xff]
  %v339 = vld [vmem:[%s4] sm:$0x1]
  %v341 = vperm.slane %v339, 0
  %v344 = vsel %vm304, %v272, 0
  %v347 = vsel %vm304, %v273, 0
  %v350 = vsel %vm304, %v274, 0
  %v353 = vsel %vm304, %v275, 0
  %v356 = vsel %vm304, %v276, 0
  %v359 = vsel %vm304, %v277, 0
  %v362 = vsel %vm304, %v278, 0
  %v365 = vsel %vm304, %v279, 0
  %v368 = vsel %vm304, %v280, 0
  %v371 = vsel %vm304, %v281, 0
  %v374 = vsel %vm304, %v282, 0
  %v377 = vsel %vm304, %v283, 0
  %v380 = vsel %vm304, %v284, 0
  %v383 = vsel %vm304, %v285, 0
  %v386 = vsel %vm304, %v286, 0
  %v389 = vsel %vm304, %v287, 0
  %v392 = vsel %vm304, %v288, 0
  %v395 = vsel %vm304, %v289, 0
  %v398 = vsel %vm304, %v290, 0
  %v401 = vsel %vm304, %v291, 0
  %v404 = vsel %vm304, %v292, 0
  %v407 = vsel %vm304, %v293, 0
  %v410 = vsel %vm304, %v294, 0
  %v413 = vsel %vm304, %v295, 0
  %v416 = vsel %vm304, %v296, 0
  %v419 = vsel %vm304, %v297, 0
  %v422 = vsel %vm304, %v298, 0
  %v425 = vsel %vm304, %v299, 0
  %v428 = vsel %vm304, %v300, 0
  %v431 = vsel %vm304, %v301, 0
  %v434 = vsel %vm304, %v302, 0
  %v437 = vsel %vm304, %v303, 0
  %439 = vmatpush.msra.mxu0 0.0
  %440 = vmatpush.msra.mxu0 0.0
  %441 = vmatpush.msra.mxu0 0.0
  %442 = vmatpush.msra.mxu0 0.0
  %443 = vmatpush.msra.mxu0 0.0
  %444 = vmatpush.msra.mxu0 0.0
  %445 = vmatpush.msra.mxu0 0.0
  %446 = vmatpush.msra.mxu0 0.0
  %447 = vmatpush.msra.mxu0 0.0
  %448 = vmatpush.msra.mxu0 0.0
  %449 = vmatpush.msra.mxu0 0.0
  %450 = vmatpush.msra.mxu0 0.0
  %451 = vmatpush.msra.mxu0 0.0
  %452 = vmatpush.msra.mxu0 0.0
  %453 = vmatpush.msra.mxu0 %v338
  %454 = vmatpush.msra.mxu0 %v337
  %455 = vmatmul.f32.gmra.mxu0 %v344
  %v456 = vpop.f32.mrf.mxu0
  %v457 = vadd.f32 %v341, %v456
  %458 = vmatmul.f32.gmra.mxu0 %v347
  %v459 = vpop.f32.mrf.mxu0
  %v460 = vadd.f32 %v341, %v459
  %461 = vmatmul.f32.gmra.mxu0 %v350
  %v462 = vpop.f32.mrf.mxu0
  %v463 = vadd.f32 %v341, %v462
  %464 = vmatmul.f32.gmra.mxu0 %v353
  %v465 = vpop.f32.mrf.mxu0
  %v466 = vadd.f32 %v341, %v465
  %467 = vmatmul.f32.gmra.mxu0 %v356
  %v468 = vpop.f32.mrf.mxu0
  %v469 = vadd.f32 %v341, %v468
  %470 = vmatmul.f32.gmra.mxu0 %v359
  %v471 = vpop.f32.mrf.mxu0
  %v472 = vadd.f32 %v341, %v471
  %473 = vmatmul.f32.gmra.mxu0 %v362
  %v474 = vpop.f32.mrf.mxu0
  %v475 = vadd.f32 %v341, %v474
  %476 = vmatmul.f32.gmra.mxu0 %v365
  %v477 = vpop.f32.mrf.mxu0
  %v478 = vadd.f32 %v341, %v477
  %479 = vmatmul.f32.gmra.mxu0 %v368
  %v480 = vpop.f32.mrf.mxu0
  %v481 = vadd.f32 %v341, %v480
  %482 = vmatmul.f32.gmra.mxu0 %v371
  %v483 = vpop.f32.mrf.mxu0
  %v484 = vadd.f32 %v341, %v483
  %485 = vmatmul.f32.gmra.mxu0 %v374
  %v486 = vpop.f32.mrf.mxu0
  %v487 = vadd.f32 %v341, %v486
  %488 = vmatmul.f32.gmra.mxu0 %v377
  %v489 = vpop.f32.mrf.mxu0
  %v490 = vadd.f32 %v341, %v489
  %491 = vmatmul.f32.gmra.mxu0 %v380
  %v492 = vpop.f32.mrf.mxu0
  %v493 = vadd.f32 %v341, %v492
  %494 = vmatmul.f32.gmra.mxu0 %v383
  %v495 = vpop.f32.mrf.mxu0
  %v496 = vadd.f32 %v341, %v495
  %497 = vmatmul.f32.gmra.mxu0 %v386
  %v498 = vpop.f32.mrf.mxu0
  %v499 = vadd.f32 %v341, %v498
  %500 = vmatmul.f32.gmra.mxu0 %v389
  %v501 = vpop.f32.mrf.mxu0
  %v502 = vadd.f32 %v341, %v501
  %503 = vmatmul.f32.gmra.mxu0 %v392
  %v504 = vpop.f32.mrf.mxu0
  %v505 = vadd.f32 %v341, %v504
  %506 = vmatmul.f32.gmra.mxu0 %v395
  %v507 = vpop.f32.mrf.mxu0
  %v508 = vadd.f32 %v341, %v507
  %509 = vmatmul.f32.gmra.mxu0 %v398
  %v510 = vpop.f32.mrf.mxu0
  %v511 = vadd.f32 %v341, %v510
  %512 = vmatmul.f32.gmra.mxu0 %v401
  %v513 = vpop.f32.mrf.mxu0
  %v514 = vadd.f32 %v341, %v513
  %515 = vmatmul.f32.gmra.mxu0 %v404
  %v516 = vpop.f32.mrf.mxu0
  %v517 = vadd.f32 %v341, %v516
  %518 = vmatmul.f32.gmra.mxu0 %v407
  %v519 = vpop.f32.mrf.mxu0
  %v520 = vadd.f32 %v341, %v519
  %521 = vmatmul.f32.gmra.mxu0 %v410
  %v522 = vpop.f32.mrf.mxu0
  %v523 = vadd.f32 %v341, %v522
  %524 = vmatmul.f32.gmra.mxu0 %v413
  %v525 = vpop.f32.mrf.mxu0
  %v526 = vadd.f32 %v341, %v525
  %527 = vmatmul.f32.gmra.mxu0 %v416
  %v528 = vpop.f32.mrf.mxu0
  %v529 = vadd.f32 %v341, %v528
  %530 = vmatmul.f32.gmra.mxu0 %v419
  %v531 = vpop.f32.mrf.mxu0
  %v532 = vadd.f32 %v341, %v531
  %533 = vmatmul.f32.gmra.mxu0 %v422
  %v534 = vpop.f32.mrf.mxu0
  %v535 = vadd.f32 %v341, %v534
  %536 = vmatmul.f32.gmra.mxu0 %v425
  %v537 = vpop.f32.mrf.mxu0
  %v538 = vadd.f32 %v341, %v537
  %539 = vmatmul.f32.gmra.mxu0 %v428
  %v540 = vpop.f32.mrf.mxu0
  %v541 = vadd.f32 %v341, %v540
  %542 = vmatmul.f32.gmra.mxu0 %v431
  %v543 = vpop.f32.mrf.mxu0
  %v544 = vadd.f32 %v341, %v543
  %545 = vmatmul.f32.gmra.mxu0 %v434
  %v546 = vpop.f32.mrf.mxu0
  %v547 = vadd.f32 %v341, %v546
  %548 = vmatmul.f32.gmra.mxu0 %v437
  %v549 = vpop.f32.mrf.mxu0
  %v550 = vadd.f32 %v341, %v549
  %551 = vdwg.mxu0
  %v552 = vmax.f32 %v457, 0.0
  %v553 = vmax.f32 %v460, 0.0
  %v554 = vmax.f32 %v463, 0.0
  %v555 = vmax.f32 %v466, 0.0
  %v556 = vmax.f32 %v469, 0.0
  %v557 = vmax.f32 %v472, 0.0
  %v558 = vmax.f32 %v475, 0.0
  %v559 = vmax.f32 %v478, 0.0
  %v560 = vmax.f32 %v481, 0.0
  %v561 = vmax.f32 %v484, 0.0
  %v562 = vmax.f32 %v487, 0.0
  %v563 = vmax.f32 %v490, 0.0
  %v564 = vmax.f32 %v493, 0.0
  %v565 = vmax.f32 %v496, 0.0
  %v566 = vmax.f32 %v499, 0.0
  %v567 = vmax.f32 %v502, 0.0
  %v568 = vmax.f32 %v505, 0.0
  %v569 = vmax.f32 %v508, 0.0
  %v570 = vmax.f32 %v511, 0.0
  %v571 = vmax.f32 %v514, 0.0
  %v572 = vmax.f32 %v517, 0.0
  %v573 = vmax.f32 %v520, 0.0
  %v574 = vmax.f32 %v523, 0.0
  %v575 = vmax.f32 %v526, 0.0
  %v576 = vmax.f32 %v529, 0.0
  %v577 = vmax.f32 %v532, 0.0
  %v578 = vmax.f32 %v535, 0.0
  %v579 = vmax.f32 %v538, 0.0
  %v580 = vmax.f32 %v541, 0.0
  %v581 = vmax.f32 %v544, 0.0
  %v582 = vmax.f32 %v547, 0.0
  %v583 = vmax.f32 %v550, 0.0
  %584 = vst.msk [vmem:[%s6] sm:$0xff] %vm62, %v552
  %585 = vst.msk [vmem:[%s6 + $0x8] sm:$0xff] %vm62, %v553
  %586 = vst.msk [vmem:[%s6 + $0x10] sm:$0xff] %vm62, %v554
  %587 = vst.msk [vmem:[%s6 + $0x18] sm:$0xff] %vm62, %v555
  %588 = vst.msk [vmem:[%s6 + $0x20] sm:$0xff] %vm62, %v556
  %589 = vst.msk [vmem:[%s6 + $0x28] sm:$0xff] %vm62, %v557
  %590 = vst.msk [vmem:[%s6 + $0x30] sm:$0xff] %vm62, %v558
  %591 = vst.msk [vmem:[%s6 + $0x38] sm:$0xff] %vm62, %v559
  %592 = vst.msk [vmem:[%s6 + $0x40] sm:$0xff] %vm62, %v560
  %593 = vst.msk [vmem:[%s6 + $0x48] sm:$0xff] %vm62, %v561
  %594 = vst.msk [vmem:[%s6 + $0x50] sm:$0xff] %vm62, %v562
  %595 = vst.msk [vmem:[%s6 + $0x58] sm:$0xff] %vm62, %v563
  %596 = vst.msk [vmem:[%s6 + $0x60] sm:$0xff] %vm62, %v564
  %597 = vst.msk [vmem:[%s6 + $0x68] sm:$0xff] %vm62, %v565
  %598 = vst.msk [vmem:[%s6 + $0x70] sm:$0xff] %vm62, %v566
  %599 = vst.msk [vmem:[%s6 + $0x78] sm:$0xff] %vm62, %v567
  %600 = vst.msk [vmem:[%s6 + $0x80] sm:$0xff] %vm62, %v568
  %601 = vst.msk [vmem:[%s6 + $0x88] sm:$0xff] %vm62, %v569
  %602 = vst.msk [vmem:[%s6 + $0x90] sm:$0xff] %vm62, %v570
  %603 = vst.msk [vmem:[%s6 + $0x98] sm:$0xff] %vm62, %v571
  %604 = vst.msk [vmem:[%s6 + $0xa0] sm:$0xff] %vm62, %v572
  %605 = vst.msk [vmem:[%s6 + $0xa8] sm:$0xff] %vm62, %v573
  %606 = vst.msk [vmem:[%s6 + $0xb0] sm:$0xff] %vm62, %v574
  %607 = vst.msk [vmem:[%s6 + $0xb8] sm:$0xff] %vm62, %v575
  %608 = vst.msk [vmem:[%s6 + $0xc0] sm:$0xff] %vm62, %v576
  %609 = vst.msk [vmem:[%s6 + $0xc8] sm:$0xff] %vm62, %v577
  %610 = vst.msk [vmem:[%s6 + $0xd0] sm:$0xff] %vm62, %v578
  %611 = vst.msk [vmem:[%s6 + $0xd8] sm:$0xff] %vm62, %v579
  %612 = vst.msk [vmem:[%s6 + $0xe0] sm:$0xff] %vm62, %v580
  %613 = vst.msk [vmem:[%s6 + $0xe8] sm:$0xff] %vm62, %v581
  %614 = vst.msk [vmem:[%s6 + $0xf0] sm:$0xff] %vm62, %v582
  %615 = vst.msk [vmem:[%s6 + $0xf8] sm:$0xff] %vm62, %v583
  // Predicated region
  $region22: #{ae_forward.1} parent=0 // pred_check
    _
  $region23: #{ae_forward.1} parent=0 // pred_check_branch
    %617 = sbr.rel (0) target = $region25
  $region24: #{ae_forward.1} parent=0 // pred_region
    _
  $region25: #{ae_forward.1} parent=0 // pred_fallthru
    _
  // Predicated region
  $region26: #{ae_forward.1} parent=0 // pred_check
    _
  $region27: #{ae_forward.1} parent=0 // pred_check_branch
    %619 = sbr.rel (0) target = $region29
  $region28: #{ae_forward.1} parent=0 // pred_region
    _
  $region29: #{ae_forward.1} parent=0 // pred_fallthru
    _
  // Predicated region
  $region30: #{ae_forward.1} parent=0 // pred_check
    _
  $region31: #{ae_forward.1} parent=0 // pred_check_branch
    %621 = sbr.rel (0) target = $region33
  $region32: #{ae_forward.1} parent=0 // pred_region
    _
  $region33: #{ae_forward.1} parent=0 // pred_fallthru
    _
  // Predicated region
  $region34: #{ae_forward.1} parent=0 // pred_check
    _
  $region35: #{ae_forward.1} parent=0 // pred_check_branch
    %623 = sbr.rel (0) target = $region37
  $region36: #{ae_forward.1} parent=0 // pred_region
    _
  $region37: #{ae_forward.1} parent=0 // pred_fallthru
    _

</llo_original>
